<compile_context>
chip_gen: v7x
topology: tpu7x:2x2x1
jax: 0.10.0
libtpu: 0.0.40
codegen_flags: <defaults>
</compile_context>

<pallas_src>
import functools
import math

import jax
import jax.numpy as jnp
from jax.experimental import pallas as pl
from jax.experimental.pallas import tpu as pltpu

VMEM_LIMIT = 64 * 1024 * 1024  # safe on all generations (v7x physical = 64 MiB)


# ----------------------------------------------------------------------------
# Helpers
# ----------------------------------------------------------------------------
def _choose_tile(dim, target, align):
    """Largest tile <= target that divides `dim` and is `align`-aligned; else full dim."""
    if dim <= target:
        return dim
    t = (target // align) * align
    while t >= align:
        if dim % t == 0:
            return t
        t -= align
    return dim


def _head_group(nh, dh):
    """Heads per attention grid step: smallest group whose minor block is a
    multiple of 128 lanes (lane-dense stores); otherwise all heads, so the
    minor block equals the full hidden dim (always legal)."""
    for hpg in range(1, nh + 1):
        if nh % hpg == 0 and (hpg * dh) % 128 == 0:
            return hpg
    return nh


# ----------------------------------------------------------------------------
# Kernel: tiled dense  y = act(x @ w + b)   (bf16 in, f32 accumulate, bf16 out)
# ----------------------------------------------------------------------------
def _dense_kernel(x_ref, w_ref, b_ref, o_ref, acc_ref, *, activation):
    k = pl.program_id(2)

    @pl.when(k == 0)
    def _():
        acc_ref[...] = jnp.zeros_like(acc_ref)

    acc_ref[...] += jnp.dot(x_ref[...], w_ref[...],
                            preferred_element_type=jnp.float32)

    @pl.when(k == pl.num_programs(2) - 1)
    def _():
        y = acc_ref[...] + b_ref[...].astype(jnp.float32)
        if activation == "gelu":
            c = math.sqrt(2.0 / math.pi)
            y = 0.5 * y * (1.0 + jnp.tanh(c * (y + 0.044715 * y * y * y)))
        elif activation == "tanh":
            y = jnp.tanh(y)
        o_ref[...] = y.astype(o_ref.dtype)


def dense(x, w, b, activation="none", *, tm=512, tn=1024, tk=1024):
    M, K = x.shape
    _, N = w.shape
    tm = _choose_tile(M, tm, 16)
    tn = _choose_tile(N, tn, 128)
    tk = _choose_tile(K, tk, 128)
    grid = (M // tm, N // tn, K // tk)
    return pl.pallas_call(
        functools.partial(_dense_kernel, activation=activation),
        out_shape=jax.ShapeDtypeStruct((M, N), jnp.bfloat16),
        grid_spec=pltpu.PrefetchScalarGridSpec(
            num_scalar_prefetch=0,
            grid=grid,
            in_specs=[
                pl.BlockSpec((tm, tk), lambda i, j, k: (i, k)),
                pl.BlockSpec((tk, tn), lambda i, j, k: (k, j)),
                pl.BlockSpec((1, tn), lambda i, j, k: (0, j)),
            ],
            out_specs=pl.BlockSpec((tm, tn), lambda i, j, k: (i, j)),
            scratch_shapes=[pltpu.VMEM((tm, tn), jnp.float32)],
        ),
        compiler_params=pltpu.CompilerParams(
            dimension_semantics=("parallel", "parallel", "arbitrary"),
            vmem_limit_bytes=VMEM_LIMIT),
    )(x, w, b.reshape(1, N))


# ----------------------------------------------------------------------------
# Kernel: fused QKV projection.  x is read once; three (tm, H) accumulators;
# outputs Q, K, V already laid out as (B*S, H) so attention can consume them
# directly (no XLA reshape/transpose).  tk usually == K -> weights VMEM-resident.
# ----------------------------------------------------------------------------
def _qkv_kernel(x_ref, wq_ref, wk_ref, wv_ref, bq_ref, bk_ref, bv_ref,
                q_ref, k_ref, v_ref, qacc, kacc, vacc):
    ks = pl.program_id(1)

    @pl.when(ks == 0)
    def _():
        qacc[...] = jnp.zeros_like(qacc)
        kacc[...] = jnp.zeros_like(kacc)
        vacc[...] = jnp.zeros_like(vacc)

    x = x_ref[...]
    qacc[...] += jnp.dot(x, wq_ref[...], preferred_element_type=jnp.float32)
    kacc[...] += jnp.dot(x, wk_ref[...], preferred_element_type=jnp.float32)
    vacc[...] += jnp.dot(x, wv_ref[...], preferred_element_type=jnp.float32)

    @pl.when(ks == pl.num_programs(1) - 1)
    def _():
        q_ref[...] = (qacc[...] + bq_ref[...].astype(jnp.float32)).astype(q_ref.dtype)
        k_ref[...] = (kacc[...] + bk_ref[...].astype(jnp.float32)).astype(k_ref.dtype)
        v_ref[...] = (vacc[...] + bv_ref[...].astype(jnp.float32)).astype(v_ref.dtype)


def qkv_dense(x, wq, wk, wv, bq, bk, bv, *, tm=512, tk=2048):
    M, K = x.shape
    H = wq.shape[1]
    tm = _choose_tile(M, tm, 16)
    tk = _choose_tile(K, tk, 128)          # usually == K (weight residency)
    grid = (M // tm, K // tk)
    out = jax.ShapeDtypeStruct((M, H), jnp.bfloat16)
    wspec = pl.BlockSpec((tk, H), lambda i, k: (k, 0))
    bspec = pl.BlockSpec((1, H), lambda i, k: (0, 0))
    ospec = pl.BlockSpec((tm, H), lambda i, k: (i, 0))
    return pl.pallas_call(
        _qkv_kernel,
        out_shape=(out, out, out),
        grid_spec=pltpu.PrefetchScalarGridSpec(
            num_scalar_prefetch=0,
            grid=grid,
            in_specs=[pl.BlockSpec((tm, tk), lambda i, k: (i, k)),
                      wspec, wspec, wspec, bspec, bspec, bspec],
            out_specs=[ospec, ospec, ospec],
            scratch_shapes=[pltpu.VMEM((tm, H), jnp.float32)] * 3,
        ),
        compiler_params=pltpu.CompilerParams(
            dimension_semantics=("parallel", "arbitrary"),
            vmem_limit_bytes=VMEM_LIMIT),
    )(x, wq, wk, wv, bq.reshape(1, H), bk.reshape(1, H), bv.reshape(1, H))


# ----------------------------------------------------------------------------
# Kernel: tiled dense with fused bias + residual-add + LayerNorm epilogue.
# Output N dim (= hidden size) kept whole so LN row statistics are local.
# tk usually == K -> weight DMA'd once and VMEM-resident across all row tiles.
# ----------------------------------------------------------------------------
def _dense_res_ln_kernel(x_ref, w_ref, b_ref, res_ref, g_ref, bt_ref, o_ref,
                         acc_ref, *, eps):
    k = pl.program_id(1)

    @pl.when(k == 0)
    def _():
        acc_ref[...] = jnp.zeros_like(acc_ref)

    acc_ref[...] += jnp.dot(x_ref[...], w_ref[...],
                            preferred_element_type=jnp.float32)

    @pl.when(k == pl.num_programs(1) - 1)
    def _():
        y = (acc_ref[...] + b_ref[...].astype(jnp.float32)
             + res_ref[...].astype(jnp.float32))
        mu = jnp.mean(y, axis=-1, keepdims=True)
        var = jnp.mean((y - mu) ** 2, axis=-1, keepdims=True)
        y = (y - mu) * jax.lax.rsqrt(var + eps)
        y = y * g_ref[...].astype(jnp.float32) + bt_ref[...].astype(jnp.float32)
        o_ref[...] = y.astype(o_ref.dtype)


def dense_res_ln(x, w, b, residual, gamma, beta, *, eps=1e-12, tm=512, tk=4096):
    M, K = x.shape
    _, N = w.shape
    tm = _choose_tile(M, tm, 16)
    tk = _choose_tile(K, tk, 128)          # usually == K (weight residency)
    grid = (M // tm, K // tk)
    return pl.pallas_call(
        functools.partial(_dense_res_ln_kernel, eps=eps),
        out_shape=jax.ShapeDtypeStruct((M, N), jnp.bfloat16),
        grid_spec=pltpu.PrefetchScalarGridSpec(
            num_scalar_prefetch=0,
            grid=grid,
            in_specs=[
                pl.BlockSpec((tm, tk), lambda i, k: (i, k)),
                pl.BlockSpec((tk, N), lambda i, k: (k, 0)),
                pl.BlockSpec((1, N), lambda i, k: (0, 0)),
                pl.BlockSpec((tm, N), lambda i, k: (i, 0)),
                pl.BlockSpec((1, N), lambda i, k: (0, 0)),
                pl.BlockSpec((1, N), lambda i, k: (0, 0)),
            ],
            out_specs=pl.BlockSpec((tm, N), lambda i, k: (i, 0)),
            scratch_shapes=[pltpu.VMEM((tm, N), jnp.float32)],
        ),
        compiler_params=pltpu.CompilerParams(
            dimension_semantics=("parallel", "arbitrary"),
            vmem_limit_bytes=VMEM_LIMIT),
    )(x, w, b.reshape(1, N), residual, gamma.reshape(1, N), beta.reshape(1, N))


# ----------------------------------------------------------------------------
# Kernel: attention with a single kv step (K/V per (batch, head-group) is
# VMEM-resident for BERT-scale S), full softmax per q-tile -> no online-softmax
# rescale path.  Q/K/V are read directly from the (B*S, H) QKV outputs and ctx
# is written directly into (B*S, H); head groups make the minor block lane-dense.
# ----------------------------------------------------------------------------
def _attn_kernel(q_ref, k_ref, v_ref, bias_ref, o_ref, *, scale, dh, hpg):
    bias = bias_ref[0]                               # (1, S) additive pad-mask
    outs = []
    for hh in range(hpg):                            # static unroll over heads in group
        lo = hh * dh
        q = q_ref[:, lo:lo + dh]                     # (tq, dh) bf16
        kk = k_ref[:, lo:lo + dh]                    # (S,  dh) bf16
        v = v_ref[:, lo:lo + dh]                     # (S,  dh) bf16
        # Contraction on K's minor dim (K arrives row-major from the QKV GEMM);
        # single kv step so this transpose cost is paid once per (b, hg, qi).
        s = jax.lax.dot_general(q, kk, (((1,), (1,)), ((), ())),
                                preferred_element_type=jnp.float32) * scale
        s = s + bias                                 # (tq, S)
        m = jnp.max(s, axis=-1, keepdims=True)
        p = jnp.exp(s - m)
        l = jnp.sum(p, axis=-1, keepdims=True)
        o = jnp.dot(p.astype(v.dtype), v, preferred_element_type=jnp.float32)
        outs.append(o / l)
    o_ref[...] = jnp.concatenate(outs, axis=-1).astype(o_ref.dtype)


def attention(q2, k2, v2, attn_bias, *, B, S, nh, tq=256):
    M, H = q2.shape
    dh = H // nh
    hpg = _head_group(nh, dh)
    hw = hpg * dh                                    # minor block width (128-aligned or == H)
    tq = _choose_tile(S, tq, 8)
    nq = S // tq
    grid = (B, nh // hpg, nq)
    return pl.pallas_call(
        functools.partial(_attn_kernel, scale=1.0 / math.sqrt(dh), dh=dh, hpg=hpg),
        out_shape=jax.ShapeDtypeStruct((M, H), jnp.bfloat16),
        grid_spec=pltpu.PrefetchScalarGridSpec(
            num_scalar_prefetch=0,
            grid=grid,
            in_specs=[
                pl.BlockSpec((tq, hw), lambda b, hg, qi: (b * nq + qi, hg)),
                pl.BlockSpec((S, hw), lambda b, hg, qi: (b, hg)),
                pl.BlockSpec((S, hw), lambda b, hg, qi: (b, hg)),
                pl.BlockSpec((1, 1, S), lambda b, hg, qi: (b, 0, 0)),
            ],
            out_specs=pl.BlockSpec((tq, hw), lambda b, hg, qi: (b * nq + qi, hg)),
        ),
        compiler_params=pltpu.CompilerParams(
            dimension_semantics=("parallel", "parallel", "parallel"),
            vmem_limit_bytes=VMEM_LIMIT),
    )(q2, k2, v2, attn_bias)


# ----------------------------------------------------------------------------
# Kernel: LayerNorm (no residual) for the embedding output (bf16 in/out, f32 math).
# ----------------------------------------------------------------------------
def _ln_kernel(x_ref, g_ref, b_ref, o_ref, *, eps):
    x = x_ref[...].astype(jnp.float32)
    mu = jnp.mean(x, axis=-1, keepdims=True)
    var = jnp.mean((x - mu) ** 2, axis=-1, keepdims=True)
    y = (x - mu) * jax.lax.rsqrt(var + eps)
    y = y * g_ref[...].astype(jnp.float32) + b_ref[...].astype(jnp.float32)
    o_ref[...] = y.astype(o_ref.dtype)


def layernorm(x, gamma, beta, *, eps=1e-12, tm=512):
    M, H = x.shape
    tm = _choose_tile(M, tm, 16)
    grid = (M // tm,)
    return pl.pallas_call(
        functools.partial(_ln_kernel, eps=eps),
        out_shape=jax.ShapeDtypeStruct((M, H), jnp.bfloat16),
        grid_spec=pltpu.PrefetchScalarGridSpec(
            num_scalar_prefetch=0,
            grid=grid,
            in_specs=[
                pl.BlockSpec((tm, H), lambda i: (i, 0)),
                pl.BlockSpec((1, H), lambda i: (0, 0)),
                pl.BlockSpec((1, H), lambda i: (0, 0)),
            ],
            out_specs=pl.BlockSpec((tm, H), lambda i: (i, 0)),
        ),
        compiler_params=pltpu.CompilerParams(
            dimension_semantics=("parallel",),
            vmem_limit_bytes=VMEM_LIMIT),
    )(x, gamma.reshape(1, H), beta.reshape(1, H))


# ----------------------------------------------------------------------------
# Kernel: fused pooler (tanh(Linear(CLS))) + classifier head (class dim padded
# to 128 lanes so the store is lane-dense; dropout in eval mode = identity).
# ----------------------------------------------------------------------------
def _head_kernel(cls_ref, pw_ref, pb_ref, ow_ref, ob_ref, o_ref):
    pooled = jnp.tanh(
        jnp.dot(cls_ref[...], pw_ref[...], preferred_element_type=jnp.float32)
        + pb_ref[...].astype(jnp.float32))
    logits = jnp.dot(pooled.astype(ow_ref.dtype), ow_ref[...],
                     preferred_element_type=jnp.float32)
    o_ref[...] = logits + ob_ref[...].astype(jnp.float32)


def pooler_classifier(cls, pw, pb, ow_pad, ob_pad):
    B, H = cls.shape
    NPAD = ow_pad.shape[1]
    vmem = pl.BlockSpec(memory_space=pltpu.MemorySpace.VMEM)
    return pl.pallas_call(
        _head_kernel,
        out_shape=jax.ShapeDtypeStruct((B, NPAD), jnp.float32),
        in_specs=[vmem] * 5,
        out_specs=vmem,
    )(cls, pw, pb.reshape(1, H), ow_pad, ob_pad.reshape(1, NPAD))


# ----------------------------------------------------------------------------
# Model forward (glue in plain JAX, compute in Pallas kernels)
# ----------------------------------------------------------------------------
def encoder_block(x2, B, S, attn_bias, p, nh):
    # Fused QKV projection -> Q, K, V already in (B*S, H) attention layout.
    q2, k2, v2 = qkv_dense(x2, p["wq"], p["wk"], p["wv"],
                           p["bq"], p["bk"], p["bv"])

    ctx = attention(q2, k2, v2, attn_bias, B=B, S=S, nh=nh)   # (B*S, H) bf16

    # wo projection with fused residual + LayerNorm epilogue.
    x2 = dense_res_ln(ctx, p["wo"], p["bo"], x2, p["ln1_g"], p["ln1_b"])

    # FFN: up-projection + GELU, then down-projection with fused residual + LN.
    h = dense(x2, p["w1"], p["b1"], activation="gelu")
    x2 = dense_res_ln(h, p["w2"], p["b2"], x2, p["ln2_g"], p["ln2_b"])
    return x2


def bert_classifier_forward(params, config, input_ids, token_type_ids):
    B, S = input_ids.shape
    H = config["hidden_size"]
    nh = config["num_heads"]
    nc = config["num_classes"]

    # input_mask: True where input_ids == 0; build the additive bias once (hoisted).
    pad = (input_ids == 0)
    attn_bias = jnp.where(pad, -1e9, 0.0).astype(jnp.float32).reshape(B, 1, S)

    # Word + position + token-type embeddings summed in bf16 (no f32 HBM round-trip),
    # then LayerNorm (dropout = identity in eval).
    pos_ids = jnp.arange(S, dtype=jnp.int32)
    emb = (params["word_emb"][input_ids]
           + params["pos_emb"][pos_ids][None, :, :]
           + params["type_emb"][token_type_ids])
    x2 = layernorm(emb.reshape(B * S, H), params["emb_ln_g"], params["emb_ln_b"])

    for layer in params["layers"]:
        x2 = encoder_block(x2, B, S, attn_bias, layer, nh)

    # Pooler: tanh(Linear(CLS token)), then classification head (fused kernel).
    cls = x2.reshape(B, S, H)[:, 0, :]                      # (B, H)
    logits_pad = pooler_classifier(cls, params["pooler_w"], params["pooler_b"],
                                   params["out_w_pad"], params["out_b_pad"])
    logits = logits_pad[:, :nc]
    if logits.shape[1] == 1:
        # Matches the reference's `x.squeeze()` (removes all size-1 dims).
        logits = jnp.squeeze(logits)
    return logits


# ----------------------------------------------------------------------------
# Deterministic parameter init (trunc_normal approximated with normal, std=0.02)
# Weights/embeddings in bf16; biases and LayerNorm params in f32.
# ----------------------------------------------------------------------------
def init_params(key, config):
    vocab = config["vocab_size"]
    max_seq = config["max_seq_len"]
    H = config["hidden_size"]
    L = config["num_layers"]
    inter = config["intermediate_size"]
    nc = config["num_classes"]

    keys = iter(jax.random.split(key, 8 + 6 * L))

    def nrm(shape):
        return (0.02 * jax.random.normal(next(keys), shape,
                                         jnp.float32)).astype(jnp.bfloat16)

    zeros = lambda s: jnp.zeros(s, jnp.float32)
    ones = lambda s: jnp.ones(s, jnp.float32)

    nc_pad = max(128, ((nc + 127) // 128) * 128)
    params = {
        "word_emb": nrm((vocab, H)),
        "pos_emb": nrm((max_seq, H)),
        "type_emb": nrm((2, H)),
        "emb_ln_g": ones((H,)), "emb_ln_b": zeros((H,)),
        "pooler_w": nrm((H, H)), "pooler_b": zeros((H,)),
        "out_w_pad": jnp.zeros((H, nc_pad), jnp.bfloat16).at[:, :nc].set(nrm((H, nc))),
        "out_b_pad": zeros((nc_pad,)),
        "layers": [],
    }
    for _ in range(L):
        params["layers"].append({
            "wq": nrm((H, H)), "bq": zeros((H,)),
            "wk": nrm((H, H)), "bk": zeros((H,)),
            "wv": nrm((H, H)), "bv": zeros((H,)),
            "wo": nrm((H, H)), "bo": zeros((H,)),
            "ln1_g": ones((H,)), "ln1_b": zeros((H,)),
            "w1": nrm((H, inter)), "b1": zeros((inter,)),
            "w2": nrm((inter, H)), "b2": zeros((H,)),
            "ln2_g": ones((H,)), "ln2_b": zeros((H,)),
        })
    return params


if __name__ == "__main__":
    # Small config consistent with the module.
    config = dict(hidden_size=32, num_heads=4, num_layers=2,
                  intermediate_size=64, vocab_size=50, max_seq_len=16,
                  num_classes=3)
    B, S = 2, 8

    key = jax.random.PRNGKey(0)
    k_param, k_ids = jax.random.split(key, 2)

    params = init_params(k_param, config)

    input_ids = jax.random.randint(k_ids, (B, S), 1, config["vocab_size"],
                                   dtype=jnp.int32)
    # Add some padding (id 0) so the attention-mask path is exercised.
    input_ids = input_ids.at[1, 6:].set(0)
    token_type_ids = jnp.concatenate(
        [jnp.zeros((B, S // 2), jnp.int32), jnp.ones((B, S // 2), jnp.int32)],
        axis=1)

    logits = bert_classifier_forward(params, config, input_ids, token_type_ids)
    logits = jax.block_until_ready(logits)
    assert logits.shape == (B, config["num_classes"]), logits.shape
    assert bool(jnp.all(jnp.isfinite(logits)))
    print("KERNEL_OK")
</pallas_src>

<mosaic_0001>
module attributes {stable_mosaic.version = 11 : i64} {
  func.func @_ln_kernel(%arg0: i32, %arg1: memref<16x32xbf16, #tpu.memory_space<vmem>>, %arg2: memref<1x32xf32, #tpu.memory_space<vmem>>, %arg3: memref<1x32xf32, #tpu.memory_space<vmem>>, %arg4: memref<16x32xbf16, #tpu.memory_space<vmem>>) attributes {dimension_semantics = [#tpu.dimension_semantics<parallel>], iteration_bounds = array<i64: 1>, scalar_prefetch = 0 : i64, scratch_operands = 0 : i64, tpu.core_type = #tpu.core_type<tc>, window_params = [{transform_indices = @transform_0, window_bounds = array<i64: 16, 32>}, {pipeline_mode = #tpu.pipeline_mode<synchronous>, transform_indices = @transform_1, window_bounds = array<i64: 1, 32>}, {pipeline_mode = #tpu.pipeline_mode<synchronous>, transform_indices = @transform_2, window_bounds = array<i64: 1, 32>}, {transform_indices = @transform_3, window_bounds = array<i64: 16, 32>}]} {
    %c0 = arith.constant 0 : index
    %c0_0 = arith.constant 0 : index
    %0 = vector.load %arg1[%c0, %c0_0] : memref<16x32xbf16, #tpu.memory_space<vmem>>, vector<16x32xbf16>
    %1 = arith.extf %0 : vector<16x32xbf16> to vector<16x32xf32>
    %cst = arith.constant dense<0.000000e+00> : vector<16xf32>
    %2 = vector.multi_reduction <add>, %1, %cst [1] : vector<16x32xf32> to vector<16xf32>
    %3 = vector.shape_cast %2 : vector<16xf32> to vector<16x1xf32>
    %cst_1 = arith.constant 3.200000e+01 : f32
    %4 = vector.broadcast %cst_1 : f32 to vector<16x1xf32>
    %5 = arith.divf %3, %4 : vector<16x1xf32>
    %6 = vector.broadcast %5 : vector<16x1xf32> to vector<16x32xf32>
    %7 = arith.subf %1, %6 : vector<16x32xf32>
    %8 = arith.mulf %7, %7 : vector<16x32xf32>
    %cst_2 = arith.constant dense<0.000000e+00> : vector<16xf32>
    %9 = vector.multi_reduction <add>, %8, %cst_2 [1] : vector<16x32xf32> to vector<16xf32>
    %10 = vector.shape_cast %9 : vector<16xf32> to vector<16x1xf32>
    %cst_3 = arith.constant 3.200000e+01 : f32
    %11 = vector.broadcast %cst_3 : f32 to vector<16x1xf32>
    %12 = arith.divf %10, %11 : vector<16x1xf32>
    %13 = vector.broadcast %5 : vector<16x1xf32> to vector<16x32xf32>
    %14 = arith.subf %1, %13 : vector<16x32xf32>
    %cst_4 = arith.constant 9.99999996E-13 : f32
    %15 = vector.broadcast %cst_4 : f32 to vector<16x1xf32>
    %16 = arith.addf %12, %15 : vector<16x1xf32>
    %17 = math.rsqrt %16 : vector<16x1xf32>
    %18 = vector.broadcast %17 : vector<16x1xf32> to vector<16x32xf32>
    %19 = arith.mulf %14, %18 : vector<16x32xf32>
    %c0_5 = arith.constant 0 : index
    %c0_6 = arith.constant 0 : index
    %20 = vector.load %arg2[%c0_5, %c0_6] : memref<1x32xf32, #tpu.memory_space<vmem>>, vector<1x32xf32>
    %21 = vector.broadcast %20 : vector<1x32xf32> to vector<16x32xf32>
    %22 = arith.mulf %19, %21 : vector<16x32xf32>
    %c0_7 = arith.constant 0 : index
    %c0_8 = arith.constant 0 : index
    %23 = vector.load %arg3[%c0_7, %c0_8] : memref<1x32xf32, #tpu.memory_space<vmem>>, vector<1x32xf32>
    %24 = vector.broadcast %23 : vector<1x32xf32> to vector<16x32xf32>
    %25 = arith.addf %22, %24 : vector<16x32xf32>
    %26 = arith.truncf %25 : vector<16x32xf32> to vector<16x32xbf16>
    %c0_9 = arith.constant 0 : index
    %c0_10 = arith.constant 0 : index
    %27 = vector.load %arg4[%c0_9, %c0_10] : memref<16x32xbf16, #tpu.memory_space<vmem>>, vector<16x32xbf16>
    tpu.vector_store %arg4[%c0_9, %c0_10], %26 {strides = array<i32>} : memref<16x32xbf16, #tpu.memory_space<vmem>>, vector<16x32xbf16>,
    return
  }
  func.func @transform_0(%arg0: i32) -> (i32, i32) {
    %c0_i32 = arith.constant 0 : i32
    %c0_i32_0 = arith.constant 0 : i32
    return %arg0, %c0_i32 : i32, i32
  }
  func.func @transform_1(%arg0: i32) -> (i32, i32) {
    %c0_i32 = arith.constant 0 : i32
    %c0_i32_0 = arith.constant 0 : i32
    %c0_i32_1 = arith.constant 0 : i32
    return %c0_i32, %c0_i32_0 : i32, i32
  }
  func.func @transform_2(%arg0: i32) -> (i32, i32) {
    %c0_i32 = arith.constant 0 : i32
    %c0_i32_0 = arith.constant 0 : i32
    %c0_i32_1 = arith.constant 0 : i32
    return %c0_i32, %c0_i32_0 : i32, i32
  }
  func.func @transform_3(%arg0: i32) -> (i32, i32) {
    %c0_i32 = arith.constant 0 : i32
    %c0_i32_0 = arith.constant 0 : i32
    return %arg0, %c0_i32 : i32, i32
  }
}

</mosaic_0001>

<llo_original>
// kernel: tpu_custom_call.1
$region0: #{tpu_custom_call.1}
  #allocation0 [shape = 'u32[]', space=smem, size = 0x4, offset = 0x4, fixed_abs, tag = 'smem constant byte address 0x4 - core index']
  #allocation1 [shape = 'u32[144,128]{1,0:T(1,128)}', space=vmem, size = 0x12000, scoped, tag = 'internal scratch']
  %s0 = inlined_call_operand.hbm [shape: bf16[16,32], index: 0, kind: input, shape index: {}]
  %s1 = inlined_call_operand.hbm [shape: f32[1,32], index: 1, kind: input, shape index: {}]
  %s2 = inlined_call_operand.hbm [shape: f32[1,32], index: 2, kind: input, shape index: {}]
  %s3 = inlined_call_operand.hbm [shape: bf16[16,32], index: 3, kind: output, shape index: {}]
  %s4 = sld [smem:[#allocation0]]
  $region34: #{tpu_custom_call.1} parent=0
    _
  %s6 = ssub.s32 1, %s4
  %s7 = scalar_select 0, %s6, %s4
  $region1: #{tpu_custom_call.1} parent=0
    #allocation2 [shape = 'u8[4096]{0}', space=vmem, size = 0x1000, scoped, tag = 'input window, operand 0, single buffered']
    #allocation3 [shape = 's32[1]{0}', space=sflag, size = 0x4, scoped, tag = 'scoped memory for tpu_custom_call.1']
    #allocation4 [shape = 's32[1]{0}', space=sflag, size = 0x4, scoped, tag = 'scoped memory for tpu_custom_call.1']
    #allocation5 [shape = 'u8[512]{0}', space=vmem, size = 0x400, scoped, tag = 'input window, operand 1, single buffered']
    #allocation6 [shape = 's32[1]{0}', space=sflag, size = 0x4, scoped, tag = 'scoped memory for tpu_custom_call.1']
    #allocation7 [shape = 'u8[512]{0}', space=vmem, size = 0x400, scoped, tag = 'input window, operand 2, single buffered']
    #allocation8 [shape = 'u8[4096]{0}', space=vmem, size = 0x1000, scoped, tag = 'output window, operand 0, single buffered']
    %8 = vsyncpa [#allocation3], 0
    %9 = vsyncpa [#allocation6], 0
    %10 = vsyncpa [#allocation4], 0
    // Predicated region
    $region2: #{tpu_custom_call.1} parent=1 // pred_check
      _
    $region3: #{tpu_custom_call.1} parent=1 // pred_check_branch
      %12 = sbr.rel (0) target = $region5
    $region4: #{tpu_custom_call.1} parent=1 // pred_region
      %s14 = ssub.s32 128, 128
      %15 = vsyncadd [#allocation3], %s14
      %s16 = sshll.u32 [#allocation2], 4
      %s17 = int_to_ptr.vmem [resolvable:$true] %s16
      %22 = dma.hbm_to_vmem [thread:$0]  %s0, 128, %s17, [#allocation3], 64, 64, 4
    $region5: #{tpu_custom_call.1} parent=1 // pred_fallthru
      _
    // Predicated region
    $region6: #{tpu_custom_call.1} parent=1 // pred_check
      _
    $region7: #{tpu_custom_call.1} parent=1 // pred_check_branch
      %24 = sbr.rel (0) target = $region9
    $region8: #{tpu_custom_call.1} parent=1 // pred_region
      %s26 = ssub.s32 16, 16
      %27 = vsyncadd [#allocation6], %s26
      %s29 = sshll.u32 [#allocation5], 4
      %s30 = int_to_ptr.vmem [resolvable:$true] %s29
      %32 = dma.hbm_to_vmem [thread:$0]  %s1, 16, %s30, [#allocation6]
    $region9: #{tpu_custom_call.1} parent=1 // pred_fallthru
      _
    // Predicated region
    $region10: #{tpu_custom_call.1} parent=1 // pred_check
      _
    $region11: #{tpu_custom_call.1} parent=1 // pred_check_branch
      %34 = sbr.rel (0) target = $region13
    $region12: #{tpu_custom_call.1} parent=1 // pred_region
      %s36 = ssub.s32 16, 16
      %37 = vsyncadd [#allocation6], %s36
      %s39 = sshll.u32 [#allocation7], 4
      %s40 = int_to_ptr.vmem [resolvable:$true] %s39
      %42 = dma.hbm_to_vmem [thread:$0]  %s2, 16, %s40, [#allocation6]
    $region13: #{tpu_custom_call.1} parent=1 // pred_fallthru
      _
    // Predicated region
    $region14: #{tpu_custom_call.1} parent=1 // pred_check
      _
    $region15: #{tpu_custom_call.1} parent=1 // pred_check_branch
      %44 = sbr.rel (0) target = $region17
    $region16: #{tpu_custom_call.1} parent=1 // pred_region
      %45 = dma.done [#allocation3], 128
    $region17: #{tpu_custom_call.1} parent=1 // pred_fallthru
      _
    // Predicated region
    $region18: #{tpu_custom_call.1} parent=1 // pred_check
      _
    $region19: #{tpu_custom_call.1} parent=1 // pred_check_branch
      %47 = sbr.rel (0) target = $region21
    $region20: #{tpu_custom_call.1} parent=1 // pred_region
      %48 = dma.done [#allocation6], 16
    $region21: #{tpu_custom_call.1} parent=1 // pred_fallthru
      _
    // Predicated region
    $region22: #{tpu_custom_call.1} parent=1 // pred_check
      _
    $region23: #{tpu_custom_call.1} parent=1 // pred_check_branch
      %50 = sbr.rel (0) target = $region25
    $region24: #{tpu_custom_call.1} parent=1 // pred_region
      %51 = dma.done [#allocation6], 16
    $region25: #{tpu_custom_call.1} parent=1 // pred_fallthru
      _
    %v52 = vld [vmem:[#allocation2] sm:$0xf]
    %v53 = vld [vmem:[#allocation2 + $0x4] sm:$0xf]
    %v54 = vunpack.c.l.bf16 %v52
    %v55 = vunpack.c.l.bf16 %v53
    %vm56 = vcmask 261120
    %v57 = vsel %vm56, %v54, 0.0
    %58 = vadd.xlane.f32.xlu0 %v57
    %v59 = vpop.xlane.xlu0 %58
    %v60 = vsel %vm56, %v55, 0.0
    %61 = vadd.xlane.f32.xlu0 %v60
    %v62 = vpop.xlane.xlu0 %61
    %v63 = vrcp.pop 32.0
    %v64 = vmul.f32 %v59, %v63
    %v65 = vmul.f32 %v62, %v63
    %v66 = vsub.f32 %v54, %v64
    %v67 = vsub.f32 %v55, %v65
    %v68 = vmul.f32 %v66, %v66
    %v69 = vmul.f32 %v67, %v67
    %v70 = vsel %vm56, %v68, 0.0
    %71 = vadd.xlane.f32.xlu0 %v70
    %v72 = vpop.xlane.xlu0 %71
    %v73 = vsel %vm56, %v69, 0.0
    %74 = vadd.xlane.f32.xlu0 %v73
    %v75 = vpop.xlane.xlu0 %74
    %v76 = vmul.f32 %v72, %v63
    %v77 = vmul.f32 %v75, %v63
    %v78 = vadd.f32 %v76, 1e-12
    %v79 = vadd.f32 %v77, 1e-12
    %v80 = vrsqrt.pop %v78
    %v81 = vrsqrt.pop %v79
    %v82 = vmul.f32 %v66, %v80
    %v83 = vmul.f32 %v67, %v81
    %v84 = vld [vmem:[#allocation5] sm:$0x1]
    %v86 = vlaneseq
    %v87 = vshrl.u32 %v86, 7
    %v88 = vsub.s32 0, %v87
    %v89 = vrot.slane %v84, %v88
    %v91 = vmul.f32 %v82, %v89
    %v92 = vmul.f32 %v83, %v89
    %v93 = vld [vmem:[#allocation7] sm:$0x1]
    %v95 = vlaneseq
    %v96 = vshrl.u32 %v95, 7
    %v97 = vsub.s32 0, %v96
    %v98 = vrot.slane %v93, %v97
    %v100 = vadd.f32 %v91, %v98
    %v101 = vadd.f32 %v92, %v98
    %v102 = vpack.c.bf16 %v101, %v100
    %v104 = vunpack.c.l.b16 %v102
    %v105 = vunpack.c.h.b16 %v102
    %v106 = vpack.c.b16 %v104, %v104
    %v107 = vpack.c.b16 %v105, %v105
    %vm110 = vcmask 257024
    %111 = vst.msk [vmem:[#allocation8] sm:$0xf] %vm110, %v106
    %112 = vst.msk [vmem:[#allocation8 + $0x4] sm:$0xf] %vm110, %v107
    // Predicated region
    $region26: #{tpu_custom_call.1} parent=1 // pred_check
      _
    $region27: #{tpu_custom_call.1} parent=1 // pred_check_branch
      %114 = sbr.rel (0) target = $region29
    $region28: #{tpu_custom_call.1} parent=1 // pred_region
      %s116 = ssub.s32 128, 128
      %117 = vsyncadd [#allocation4], %s116
      %s118 = sshll.u32 [#allocation8], 4
      %s119 = int_to_ptr.vmem [resolvable:$true] %s118
      %124 = dma.vmem_to_hbm [thread:$0]  %s119, 128, %s3, [#allocation4], 64, 64, 4
    $region29: #{tpu_custom_call.1} parent=1 // pred_fallthru
      _
    // Predicated region
    $region30: #{tpu_custom_call.1} parent=1 // pred_check
      _
    $region31: #{tpu_custom_call.1} parent=1 // pred_check_branch
      %126 = sbr.rel (0) target = $region33
    $region32: #{tpu_custom_call.1} parent=1 // pred_region
      %127 = dma.done [#allocation4], 128
    $region33: #{tpu_custom_call.1} parent=1 // pred_fallthru
      _
    %128 = vsyncpa [#allocation3], 1
    %129 = vsyncpa [#allocation6], 1
    %130 = vsyncpa [#allocation4], 1

</llo_original>
